<compile_context>
chip_gen: v7x
topology: tpu7x:2x2x1
jax: 0.10.0
libtpu: 0.0.40
codegen_flags: <defaults>
</compile_context>

<pallas_src>
import functools
import math

import jax
import jax.numpy as jnp
from jax.experimental import pallas as pl
from jax.experimental.pallas import tpu as pltpu

GIN = 1024        # gin_channels (module default) -- folded away by precompose
HID = 512         # hidden width of classification head
OUT = 3           # VAD scores (valence, arousal, dominance)
OUT_PAD = 128     # lane-dense output width; real scores live in [:, :OUT]

ACT_VMEM_BUDGET = 24 * 1024 * 1024   # budget for double-buffered activations


def _round_up(x, m):
    return ((x + m - 1) // m) * m


# ----------------------------------------------------------------------------
# Fused kernel: RefEncoder stub (mean-pool, projection precomposed into head)
#               + classification head Linear->GELU->Dropout(id)->Linear->Tanh
# ----------------------------------------------------------------------------
def _vad_fused_kernel(spec_ref, sv_ref, wspec_ref, wsv_ref, b1_ref, w2_ref,
                      b2_ref, o_ref, *, use_sv, inv_t):
    # Mean-pool over time: spec block is [TB, Tp, n_mel]; axis=1 is the
    # sublane axis, so this is a cheap sublane-add (padded frames are zeros).
    pooled = jnp.sum(spec_ref[...], axis=1) * inv_t                 # [TB, n_mel] f32

    # Encoder projection + first head Linear, pre-composed into one bf16 matmul.
    h = jnp.dot(pooled.astype(jnp.bfloat16), wspec_ref[...],
                preferred_element_type=jnp.float32)                 # [TB, HID] f32
    if use_sv:   # static Python bool, baked in at trace time
        h = h + jnp.dot(sv_ref[...].astype(jnp.bfloat16), wsv_ref[...],
                        preferred_element_type=jnp.float32)
    h = h + b1_ref[...]

    # Exact GELU (PyTorch nn.GELU default = erf formulation), f32.
    h = 0.5 * h * (1.0 + jax.lax.erf(h * (1.0 / math.sqrt(2.0))))
    # Dropout(0.5): identity in eval/inference mode.

    y = jnp.dot(h.astype(jnp.bfloat16), w2_ref[...],
                preferred_element_type=jnp.float32) + b2_ref[...]   # [TB, OUT_PAD]
    o_ref[...] = jnp.tanh(y)


# ----------------------------------------------------------------------------
# Wrapper: layout, batch tiling, per-generation VMEM limit, lane-dense output
# ----------------------------------------------------------------------------
def vad_scoring_forward(spec, sv_ref, params, use_sv=True, tb_max=256):
    """spec: [B, n_mel, T] f32 (NCT spectrogram), sv_ref: [B, sv_dim] f32 -> [B, 3] f32."""
    B, n_mel, T = spec.shape
    sv_dim = sv_ref.shape[-1]

    # Time-major relayout: n_mel -> lane axis.  Callers that already hold
    # time-major features can pass spec.transpose(0, 2, 1) and skip this.
    spec_t = jnp.swapaxes(spec, 1, 2)                         # [B, T, n_mel]

    Tp = _round_up(T, 8)
    if Tp != T:   # zero-padded frames do not change the sum; we divide by true T
        spec_t = jnp.pad(spec_t, ((0, 0), (0, Tp - T), (0, 0)))

    # ---- batch tiling: TB from a VMEM activation budget, >=2 tiles if possible
    pB8 = _round_up(max(B, 8), 8)
    spec_row = Tp * _round_up(n_mel, 128) * 4
    sv_row = _round_up(sv_dim, 128) * 4
    per_row = 2 * (spec_row + sv_row + OUT_PAD * 4)           # double-buffered
    tb_fit = max(8, (ACT_VMEM_BUDGET // per_row) // 8 * 8)
    tb_cap = min(tb_max, tb_fit)
    n_tiles = max(1, pl.cdiv(pB8, tb_cap))
    if pB8 >= 16:
        n_tiles = max(n_tiles, 2)     # keep both v7x TensorCores busy
    TB = _round_up(pl.cdiv(pB8, n_tiles), 8)
    pB = TB * n_tiles                 # padding waste bounded to <8 rows per tile
    if pB != B:
        spec_t = jnp.pad(spec_t, ((0, pB - B), (0, 0), (0, 0)))
        sv_ref = jnp.pad(sv_ref, ((0, pB - B), (0, 0)))

    # ---- per-generation VMEM limit (~7/8 physical, capped at 100 MiB)
    try:
        phys_vmem = int(pltpu.get_tpu_info().vmem_capacity_bytes)
    except Exception:
        phys_vmem = 64 * 1024 * 1024
    vmem_limit = max(32 * 1024 * 1024,
                     min(phys_vmem * 7 // 8, 100 * 1024 * 1024))

    kernel = functools.partial(_vad_fused_kernel, use_sv=use_sv, inv_t=1.0 / T)
    resident = dict(pipeline_mode=pl.Buffered(1))   # weights never change: 1 buffer

    out = pl.pallas_call(
        kernel,
        out_shape=jax.ShapeDtypeStruct((pB, OUT_PAD), jnp.float32),
        grid_spec=pl.GridSpec(
            grid=(n_tiles,),
            in_specs=[
                # per-tile activations (double-buffered by the pipeline)
                pl.BlockSpec((TB, Tp, n_mel), lambda i: (i, 0, 0)),
                pl.BlockSpec((TB, sv_dim), lambda i: (i, 0)),
                # resident weights / biases: constant index_map, single buffer
                pl.BlockSpec((n_mel, HID), lambda i: (0, 0), **resident),
                pl.BlockSpec((sv_dim, HID), lambda i: (0, 0), **resident),
                pl.BlockSpec((1, HID), lambda i: (0, 0), **resident),
                pl.BlockSpec((HID, OUT_PAD), lambda i: (0, 0), **resident),
                pl.BlockSpec((1, OUT_PAD), lambda i: (0, 0), **resident),
            ],
            out_specs=pl.BlockSpec((TB, OUT_PAD), lambda i: (i, 0)),
        ),
        compiler_params=pltpu.CompilerParams(
            dimension_semantics=("parallel",),   # shard batch tiles across TCs (v7x)
            vmem_limit_bytes=int(vmem_limit)),
    )(spec_t, sv_ref, params["w_enc_spec"], params["w_enc_sv"],
      params["b1"], params["w2"], params["b2"])

    return out[:B, :OUT]


# ----------------------------------------------------------------------------
# Parameter init.  Master weights in f32 (PyTorch-style Linear init); the
# linear RefEncoder-stub projections are pre-composed with w1 and stored bf16.
# w2/b2 are zero-padded to OUT_PAD lanes for unmasked (lane-dense) stores.
# ----------------------------------------------------------------------------
def init_params(key, n_mel, sv_dim):
    ks = jax.random.split(key, 6)

    def lin_w(k, fan_in, fan_out):
        bound = 1.0 / math.sqrt(fan_in)
        return jax.random.uniform(k, (fan_in, fan_out), jnp.float32, -bound, bound)

    w_spec = lin_w(ks[0], n_mel, GIN)        # RefEncoder-stub projections
    w_sv = lin_w(ks[1], sv_dim, GIN)
    w1 = lin_w(ks[2], GIN, HID)              # classification head
    b1 = jax.random.uniform(ks[3], (1, HID), jnp.float32,
                            -1.0 / math.sqrt(GIN), 1.0 / math.sqrt(GIN))
    w2 = lin_w(ks[4], HID, OUT)
    b2 = jax.random.uniform(ks[5], (1, OUT), jnp.float32,
                            -1.0 / math.sqrt(HID), 1.0 / math.sqrt(HID))

    # Pre-compose (f32 matmul, then bf16 storage).  Valid only while the
    # RefEncoder stub is a pure linear map -- see TODO at top of file.
    w_enc_spec = (w_spec @ w1).astype(jnp.bfloat16)     # [n_mel, HID]
    w_enc_sv = (w_sv @ w1).astype(jnp.bfloat16)         # [sv_dim, HID]

    return {
        "w_enc_spec": w_enc_spec,
        "w_enc_sv": w_enc_sv,
        "b1": b1,
        "w2": jnp.pad(w2, ((0, 0), (0, OUT_PAD - OUT))).astype(jnp.bfloat16),
        "b2": jnp.pad(b2, ((0, 0), (0, OUT_PAD - OUT))),
    }


# ----------------------------------------------------------------------------
# Pure-JAX reference (same bf16 params) for a numerical sanity check
# ----------------------------------------------------------------------------
def _reference(spec, sv, params, use_sv=True):
    pooled = jnp.mean(spec, axis=-1)                                  # [B, n_mel]
    h = jnp.dot(pooled.astype(jnp.bfloat16), params["w_enc_spec"],
                preferred_element_type=jnp.float32)
    if use_sv:
        h = h + jnp.dot(sv.astype(jnp.bfloat16), params["w_enc_sv"],
                        preferred_element_type=jnp.float32)
    h = h + params["b1"]
    h = 0.5 * h * (1.0 + jax.lax.erf(h * (1.0 / math.sqrt(2.0))))
    y = jnp.dot(h.astype(jnp.bfloat16), params["w2"],
                preferred_element_type=jnp.float32) + params["b2"]
    return jnp.tanh(y)[:, :OUT]


if __name__ == "__main__":
    B, N_MEL, T, SV_DIM = 8, 128, 32, 256

    key = jax.random.PRNGKey(0)
    k_spec, k_sv, k_param = jax.random.split(key, 3)

    spec = jax.random.normal(k_spec, (B, N_MEL, T), jnp.float32)   # NCT spectrogram
    sv = jax.random.normal(k_sv, (B, SV_DIM), jnp.float32)         # SV embedding
    params = init_params(k_param, N_MEL, SV_DIM)

    vad_scores = vad_scoring_forward(spec, sv, params, use_sv=True)
    vad_scores = jax.block_until_ready(vad_scores)

    assert vad_scores.shape == (B, OUT)
    assert bool(jnp.all(jnp.abs(vad_scores) <= 1.0))               # tanh-bounded
    ref = _reference(spec, sv, params, use_sv=True)
    assert bool(jnp.all(jnp.abs(vad_scores - ref) < 3e-2))
    print("KERNEL_OK")
</pallas_src>

<mosaic_0001>
module attributes {stable_mosaic.version = 11 : i64} {
  func.func @_vad_fused_kernel(%arg0: i32, %arg1: memref<8x32x128xf32, #tpu.memory_space<vmem>>, %arg2: memref<8x256xf32, #tpu.memory_space<vmem>>, %arg3: memref<128x512xbf16, #tpu.memory_space<vmem>>, %arg4: memref<256x512xbf16, #tpu.memory_space<vmem>>, %arg5: memref<1x512xf32, #tpu.memory_space<vmem>>, %arg6: memref<512x128xbf16, #tpu.memory_space<vmem>>, %arg7: memref<1x128xf32, #tpu.memory_space<vmem>>, %arg8: memref<8x128xf32, #tpu.memory_space<vmem>>) attributes {dimension_semantics = [#tpu.dimension_semantics<parallel>], iteration_bounds = array<i64: 1>, scalar_prefetch = 0 : i64, scratch_operands = 0 : i64, tpu.core_type = #tpu.core_type<tc>, window_params = [{transform_indices = @transform_0, window_bounds = array<i64: 8, 32, 128>}, {transform_indices = @transform_1, window_bounds = array<i64: 8, 256>}, {pipeline_mode = #tpu.pipeline_mode<synchronous>, transform_indices = @transform_2, window_bounds = array<i64: 128, 512>}, {pipeline_mode = #tpu.pipeline_mode<synchronous>, transform_indices = @transform_3, window_bounds = array<i64: 256, 512>}, {pipeline_mode = #tpu.pipeline_mode<synchronous>, transform_indices = @transform_4, window_bounds = array<i64: 1, 512>}, {pipeline_mode = #tpu.pipeline_mode<synchronous>, transform_indices = @transform_5, window_bounds = array<i64: 512, 128>}, {pipeline_mode = #tpu.pipeline_mode<synchronous>, transform_indices = @transform_6, window_bounds = array<i64: 1, 128>}, {transform_indices = @transform_7, window_bounds = array<i64: 8, 128>}]} {
    %c0 = arith.constant 0 : index
    %c0_0 = arith.constant 0 : index
    %c0_1 = arith.constant 0 : index
    %0 = vector.load %arg1[%c0, %c0_0, %c0_1] : memref<8x32x128xf32, #tpu.memory_space<vmem>>, vector<8x32x128xf32>
    %cst = arith.constant dense<0.000000e+00> : vector<8x128xf32>
    %1 = vector.multi_reduction <add>, %0, %cst [1] : vector<8x32x128xf32> to vector<8x128xf32>
    %cst_2 = arith.constant 3.125000e-02 : f32
    %2 = vector.broadcast %cst_2 : f32 to vector<8x128xf32>
    %3 = arith.mulf %1, %2 : vector<8x128xf32>
    %4 = arith.truncf %3 : vector<8x128xf32> to vector<8x128xbf16>
    %c0_3 = arith.constant 0 : index
    %c0_4 = arith.constant 0 : index
    %5 = vector.load %arg3[%c0_3, %c0_4] : memref<128x512xbf16, #tpu.memory_space<vmem>>, vector<128x512xbf16>
    %cst_5 = arith.constant dense<0.000000e+00> : vector<8x512xf32>
    %6 = tpu.matmul %4, %5, %cst_5 {dimension_numbers = #tpu.dot_dimension_numbers<[1], [0], [0], [1], [0, 0, 1, 1], [], []>} : vector<8x128xbf16>, vector<128x512xbf16>, vector<8x512xf32> -> vector<8x512xf32>
    %c0_6 = arith.constant 0 : index
    %c0_7 = arith.constant 0 : index
    %7 = vector.load %arg2[%c0_6, %c0_7] : memref<8x256xf32, #tpu.memory_space<vmem>>, vector<8x256xf32>
    %8 = arith.truncf %7 : vector<8x256xf32> to vector<8x256xbf16>
    %c0_8 = arith.constant 0 : index
    %c0_9 = arith.constant 0 : index
    %9 = vector.load %arg4[%c0_8, %c0_9] : memref<256x512xbf16, #tpu.memory_space<vmem>>, vector<256x512xbf16>
    %cst_10 = arith.constant dense<0.000000e+00> : vector<8x512xf32>
    %10 = tpu.matmul %8, %9, %cst_10 {dimension_numbers = #tpu.dot_dimension_numbers<[1], [0], [0], [1], [0, 0, 1, 1], [], []>} : vector<8x256xbf16>, vector<256x512xbf16>, vector<8x512xf32> -> vector<8x512xf32>
    %11 = arith.addf %6, %10 : vector<8x512xf32>
    %c0_11 = arith.constant 0 : index
    %c0_12 = arith.constant 0 : index
    %12 = vector.load %arg5[%c0_11, %c0_12] : memref<1x512xf32, #tpu.memory_space<vmem>>, vector<1x512xf32>
    %13 = vector.broadcast %12 : vector<1x512xf32> to vector<8x512xf32>
    %14 = arith.addf %11, %13 : vector<8x512xf32>
    %cst_13 = arith.constant 5.000000e-01 : f32
    %15 = vector.broadcast %cst_13 : f32 to vector<8x512xf32>
    %16 = arith.mulf %15, %14 : vector<8x512xf32>
    %cst_14 = arith.constant 0.707106769 : f32
    %17 = vector.broadcast %cst_14 : f32 to vector<8x512xf32>
    %18 = arith.mulf %14, %17 : vector<8x512xf32>
    %19 = math.erf %18 : vector<8x512xf32>
    %cst_15 = arith.constant 1.000000e+00 : f32
    %20 = vector.broadcast %cst_15 : f32 to vector<8x512xf32>
    %21 = arith.addf %20, %19 : vector<8x512xf32>
    %22 = arith.mulf %16, %21 : vector<8x512xf32>
    %23 = arith.truncf %22 : vector<8x512xf32> to vector<8x512xbf16>
    %c0_16 = arith.constant 0 : index
    %c0_17 = arith.constant 0 : index
    %24 = vector.load %arg6[%c0_16, %c0_17] : memref<512x128xbf16, #tpu.memory_space<vmem>>, vector<512x128xbf16>
    %cst_18 = arith.constant dense<0.000000e+00> : vector<8x128xf32>
    %25 = tpu.matmul %23, %24, %cst_18 {dimension_numbers = #tpu.dot_dimension_numbers<[1], [0], [0], [1], [0, 0, 1, 1], [], []>} : vector<8x512xbf16>, vector<512x128xbf16>, vector<8x128xf32> -> vector<8x128xf32>
    %c0_19 = arith.constant 0 : index
    %c0_20 = arith.constant 0 : index
    %26 = vector.load %arg7[%c0_19, %c0_20] : memref<1x128xf32, #tpu.memory_space<vmem>>, vector<1x128xf32>
    %27 = vector.broadcast %26 : vector<1x128xf32> to vector<8x128xf32>
    %28 = arith.addf %25, %27 : vector<8x128xf32>
    %29 = math.tanh %28 : vector<8x128xf32>
    %c0_21 = arith.constant 0 : index
    %c0_22 = arith.constant 0 : index
    %30 = vector.load %arg8[%c0_21, %c0_22] : memref<8x128xf32, #tpu.memory_space<vmem>>, vector<8x128xf32>
    tpu.vector_store %arg8[%c0_21, %c0_22], %29 {strides = array<i32>} : memref<8x128xf32, #tpu.memory_space<vmem>>, vector<8x128xf32>,
    return
  }
  func.func @transform_0(%arg0: i32) -> (i32, i32, i32) {
    %c0_i32 = arith.constant 0 : i32
    %c0_i32_0 = arith.constant 0 : i32
    %c0_i32_1 = arith.constant 0 : i32
    return %arg0, %c0_i32, %c0_i32_0 : i32, i32, i32
  }
  func.func @transform_1(%arg0: i32) -> (i32, i32) {
    %c0_i32 = arith.constant 0 : i32
    %c0_i32_0 = arith.constant 0 : i32
    return %arg0, %c0_i32 : i32, i32
  }
  func.func @transform_2(%arg0: i32) -> (i32, i32) {
    %c0_i32 = arith.constant 0 : i32
    %c0_i32_0 = arith.constant 0 : i32
    %c0_i32_1 = arith.constant 0 : i32
    return %c0_i32, %c0_i32_0 : i32, i32
  }
  func.func @transform_3(%arg0: i32) -> (i32, i32) {
    %c0_i32 = arith.constant 0 : i32
    %c0_i32_0 = arith.constant 0 : i32
    %c0_i32_1 = arith.constant 0 : i32
    return %c0_i32, %c0_i32_0 : i32, i32
  }
  func.func @transform_4(%arg0: i32) -> (i32, i32) {
    %c0_i32 = arith.constant 0 : i32
    %c0_i32_0 = arith.constant 0 : i32
    %c0_i32_1 = arith.constant 0 : i32
    return %c0_i32, %c0_i32_0 : i32, i32
  }
  func.func @transform_5(%arg0: i32) -> (i32, i32) {
    %c0_i32 = arith.constant 0 : i32
    %c0_i32_0 = arith.constant 0 : i32
    %c0_i32_1 = arith.constant 0 : i32
    return %c0_i32, %c0_i32_0 : i32, i32
  }
  func.func @transform_6(%arg0: i32) -> (i32, i32) {
    %c0_i32 = arith.constant 0 : i32
    %c0_i32_0 = arith.constant 0 : i32
    %c0_i32_1 = arith.constant 0 : i32
    return %c0_i32, %c0_i32_0 : i32, i32
  }
  func.func @transform_7(%arg0: i32) -> (i32, i32) {
    %c0_i32 = arith.constant 0 : i32
    %c0_i32_0 = arith.constant 0 : i32
    return %arg0, %c0_i32 : i32, i32
  }
}

</mosaic_0001>

<llo_original>
// kernel: tpu_custom_call.1
$region0: #{tpu_custom_call.1}
  #allocation0 [shape = 'u32[]', space=smem, size = 0x4, offset = 0x4, fixed_abs, tag = 'smem constant byte address 0x4 - core index']
  #allocation1 [shape = 'u32[144,128]{1,0:T(1,128)}', space=vmem, size = 0x12000, scoped, tag = 'internal scratch']
  %s0 = inlined_call_operand.hbm [shape: f32[8,32,128], index: 0, kind: input, shape index: {}]
  %s1 = inlined_call_operand.hbm [shape: f32[8,256], index: 1, kind: input, shape index: {}]
  %s2 = inlined_call_operand.hbm [shape: bf16[128,512], index: 2, kind: input, shape index: {}]
  %s3 = inlined_call_operand.hbm [shape: bf16[256,512], index: 3, kind: input, shape index: {}]
  %s4 = inlined_call_operand.vmem [shape: f32[1,512], index: 4, kind: input, shape index: {}]
  %s5 = inlined_call_operand.hbm [shape: bf16[512,128], index: 5, kind: input, shape index: {}]
  %s6 = inlined_call_operand.vmem [shape: f32[1,128], index: 6, kind: input, shape index: {}]
  %s7 = inlined_call_operand.hbm [shape: f32[8,128], index: 7, kind: output, shape index: {}]
  %s8 = sld [smem:[#allocation0]]
  $region58: #{tpu_custom_call.1} parent=0
    _
  %s10 = ssub.s32 1, %s8
  %s11 = scalar_select 0, %s10, %s8
  $region1: #{tpu_custom_call.1} parent=0
    #allocation2 [shape = 'u8[131072]{0}', space=vmem, size = 0x20000, scoped, tag = 'input window, operand 0, single buffered']
    #allocation3 [shape = 's32[1]{0}', space=sflag, size = 0x4, scoped, tag = 'scoped memory for tpu_custom_call.1']
    #allocation4 [shape = 's32[1]{0}', space=sflag, size = 0x4, scoped, tag = 'scoped memory for tpu_custom_call.1']
    #allocation5 [shape = 'u8[8192]{0}', space=vmem, size = 0x2000, scoped, tag = 'input window, operand 1, single buffered']
    #allocation6 [shape = 's32[1]{0}', space=sflag, size = 0x4, scoped, tag = 'scoped memory for tpu_custom_call.1']
    #allocation7 [shape = 'u8[131072]{0}', space=vmem, size = 0x20000, scoped, tag = 'input window, operand 2, single buffered']
    #allocation8 [shape = 'u8[262144]{0}', space=vmem, size = 0x40000, scoped, tag = 'input window, operand 3, single buffered']
    #allocation9 [shape = 's32[1]{0}', space=sflag, size = 0x4, scoped, tag = 'scoped memory for tpu_custom_call.1']
    #allocation10 [shape = 'u8[131072]{0}', space=vmem, size = 0x20000, scoped, tag = 'input window, operand 5, single buffered']
    #allocation11 [shape = 'u8[4096]{0}', space=vmem, size = 0x1000, scoped, tag = 'output window, operand 0, single buffered']
    %12 = vsyncpa [#allocation3], 0
    %13 = vsyncpa [#allocation6], 0
    %14 = vsyncpa [#allocation9], 0
    %15 = vsyncpa [#allocation4], 0
    // Predicated region
    $region2: #{tpu_custom_call.1} parent=1 // pred_check
      _
    $region3: #{tpu_custom_call.1} parent=1 // pred_check_branch
      %17 = sbr.rel (0) target = $region5
    $region4: #{tpu_custom_call.1} parent=1 // pred_region
      %s19 = ssub.s32 4096, 4096
      %20 = vsyncadd [#allocation3], %s19
      %s21 = sshll.u32 [#allocation2], 4
      %s22 = int_to_ptr.vmem [resolvable:$true] %s21
      %27 = dma.hbm_to_vmem [thread:$0]  %s0, 4096, %s22, [#allocation3], 128, 128, 8
    $region5: #{tpu_custom_call.1} parent=1 // pred_fallthru
      _
    // Predicated region
    $region6: #{tpu_custom_call.1} parent=1 // pred_check
      _
    $region7: #{tpu_custom_call.1} parent=1 // pred_check_branch
      %29 = sbr.rel (0) target = $region9
    $region8: #{tpu_custom_call.1} parent=1 // pred_region
      %s31 = ssub.s32 256, 256
      %32 = vsyncadd [#allocation6], %s31
      %s34 = sshll.u32 [#allocation5], 4
      %s35 = int_to_ptr.vmem [resolvable:$true] %s34
      %37 = dma.hbm_to_vmem [thread:$0]  %s1, 256, %s35, [#allocation6]
    $region9: #{tpu_custom_call.1} parent=1 // pred_fallthru
      _
    // Predicated region
    $region10: #{tpu_custom_call.1} parent=1 // pred_check
      _
    $region11: #{tpu_custom_call.1} parent=1 // pred_check_branch
      %39 = sbr.rel (0) target = $region13
    $region12: #{tpu_custom_call.1} parent=1 // pred_region
      %s41 = ssub.s32 4096, 4096
      %42 = vsyncadd [#allocation6], %s41
      %s43 = sshll.u32 [#allocation7], 4
      %s44 = int_to_ptr.vmem [resolvable:$true] %s43
      %49 = dma.hbm_to_vmem [thread:$0]  %s2, 4096, %s44, [#allocation6], 256, 256, 16
    $region13: #{tpu_custom_call.1} parent=1 // pred_fallthru
      _
    // Predicated region
    $region14: #{tpu_custom_call.1} parent=1 // pred_check
      _
    $region15: #{tpu_custom_call.1} parent=1 // pred_check_branch
      %51 = sbr.rel (0) target = $region17
    $region16: #{tpu_custom_call.1} parent=1 // pred_region
      %s53 = ssub.s32 8192, 8192
      %54 = vsyncadd [#allocation9], %s53
      %s55 = sshll.u32 [#allocation8], 4
      %s56 = int_to_ptr.vmem [resolvable:$true] %s55
      %61 = dma.hbm_to_vmem [thread:$0]  %s3, 8192, %s56, [#allocation9], 256, 256, 16
    $region17: #{tpu_custom_call.1} parent=1 // pred_fallthru
      _
    // Predicated region
    $region18: #{tpu_custom_call.1} parent=1 // pred_check
      _
    $region19: #{tpu_custom_call.1} parent=1 // pred_check_branch
      %63 = sbr.rel (0) target = $region21
    $region20: #{tpu_custom_call.1} parent=1 // pred_region
      _
    $region21: #{tpu_custom_call.1} parent=1 // pred_fallthru
      _
    // Predicated region
    $region22: #{tpu_custom_call.1} parent=1 // pred_check
      _
    $region23: #{tpu_custom_call.1} parent=1 // pred_check_branch
      %65 = sbr.rel (0) target = $region25
    $region24: #{tpu_custom_call.1} parent=1 // pred_region
      %s67 = ssub.s32 4096, 4096
      %68 = vsyncadd [#allocation9], %s67
      %s69 = sshll.u32 [#allocation10], 4
      %s70 = int_to_ptr.vmem [resolvable:$true] %s69
      %75 = dma.hbm_to_vmem [thread:$0]  %s5, 4096, %s70, [#allocation9], 64, 64, 4
    $region25: #{tpu_custom_call.1} parent=1 // pred_fallthru
      _
    // Predicated region
    $region26: #{tpu_custom_call.1} parent=1 // pred_check
      _
    $region27: #{tpu_custom_call.1} parent=1 // pred_check_branch
      %77 = sbr.rel (0) target = $region29
    $region28: #{tpu_custom_call.1} parent=1 // pred_region
      _
    $region29: #{tpu_custom_call.1} parent=1 // pred_fallthru
      _
    // Predicated region
    $region30: #{tpu_custom_call.1} parent=1 // pred_check
      _
    $region31: #{tpu_custom_call.1} parent=1 // pred_check_branch
      %79 = sbr.rel (0) target = $region33
    $region32: #{tpu_custom_call.1} parent=1 // pred_region
      %80 = dma.done [#allocation3], 4096
    $region33: #{tpu_custom_call.1} parent=1 // pred_fallthru
      _
    // Predicated region
    $region34: #{tpu_custom_call.1} parent=1 // pred_check
      _
    $region35: #{tpu_custom_call.1} parent=1 // pred_check_branch
      %82 = sbr.rel (0) target = $region37
    $region36: #{tpu_custom_call.1} parent=1 // pred_region
      %83 = dma.done [#allocation6], 256
    $region37: #{tpu_custom_call.1} parent=1 // pred_fallthru
      _
    // Predicated region
    $region38: #{tpu_custom_call.1} parent=1 // pred_check
      _
    $region39: #{tpu_custom_call.1} parent=1 // pred_check_branch
      %85 = sbr.rel (0) target = $region41
    $region40: #{tpu_custom_call.1} parent=1 // pred_region
      %86 = dma.done [#allocation6], 4096
    $region41: #{tpu_custom_call.1} parent=1 // pred_fallthru
      _
    // Predicated region
    $region42: #{tpu_custom_call.1} parent=1 // pred_check
      _
    $region43: #{tpu_custom_call.1} parent=1 // pred_check_branch
      %88 = sbr.rel (0) target = $region45
    $region44: #{tpu_custom_call.1} parent=1 // pred_region
      %89 = dma.done [#allocation9], 8192
    $region45: #{tpu_custom_call.1} parent=1 // pred_fallthru
      _
    // Predicated region
    $region46: #{tpu_custom_call.1} parent=1 // pred_check
      _
    $region47: #{tpu_custom_call.1} parent=1 // pred_check_branch
      %91 = sbr.rel (0) target = $region49
    $region48: #{tpu_custom_call.1} parent=1 // pred_region
      %92 = dma.done [#allocation9], 4096
    $region49: #{tpu_custom_call.1} parent=1 // pred_fallthru
      _
    %v94 = vld [vmem:[#allocation2] sm:$0xff]
    %v95 = vld [vmem:[#allocation2 + $0x8] sm:$0xff]
    %v96 = vld [vmem:[#allocation2 + $0x10] sm:$0xff]
    %v97 = vld [vmem:[#allocation2 + $0x18] sm:$0xff]
    %v98 = vld [vmem:[#allocation2 + $0x20] sm:$0xff]
    %v99 = vld [vmem:[#allocation2 + $0x28] sm:$0xff]
    %v100 = vld [vmem:[#allocation2 + $0x30] sm:$0xff]
    %v101 = vld [vmem:[#allocation2 + $0x38] sm:$0xff]
    %v102 = vld [vmem:[#allocation2 + $0x40] sm:$0xff]
    %v103 = vld [vmem:[#allocation2 + $0x48] sm:$0xff]
    %v104 = vld [vmem:[#allocation2 + $0x50] sm:$0xff]
    %v105 = vld [vmem:[#allocation2 + $0x58] sm:$0xff]
    %v106 = vld [vmem:[#allocation2 + $0x60] sm:$0xff]
    %v107 = vld [vmem:[#allocation2 + $0x68] sm:$0xff]
    %v108 = vld [vmem:[#allocation2 + $0x70] sm:$0xff]
    %v109 = vld [vmem:[#allocation2 + $0x78] sm:$0xff]
    %v110 = vld [vmem:[#allocation2 + $0x80] sm:$0xff]
    %v111 = vld [vmem:[#allocation2 + $0x88] sm:$0xff]
    %v112 = vld [vmem:[#allocation2 + $0x90] sm:$0xff]
    %v113 = vld [vmem:[#allocation2 + $0x98] sm:$0xff]
    %v114 = vld [vmem:[#allocation2 + $0xa0] sm:$0xff]
    %v115 = vld [vmem:[#allocation2 + $0xa8] sm:$0xff]
    %v116 = vld [vmem:[#allocation2 + $0xb0] sm:$0xff]
    %v117 = vld [vmem:[#allocation2 + $0xb8] sm:$0xff]
    %v118 = vld [vmem:[#allocation2 + $0xc0] sm:$0xff]
    %v119 = vld [vmem:[#allocation2 + $0xc8] sm:$0xff]
    %v120 = vld [vmem:[#allocation2 + $0xd0] sm:$0xff]
    %v121 = vld [vmem:[#allocation2 + $0xd8] sm:$0xff]
    %v122 = vld [vmem:[#allocation2 + $0xe0] sm:$0xff]
    %v123 = vld [vmem:[#allocation2 + $0xe8] sm:$0xff]
    %v124 = vld [vmem:[#allocation2 + $0xf0] sm:$0xff]
    %v125 = vld [vmem:[#allocation2 + $0xf8] sm:$0xff]
    %v126 = vadd.f32 %v94, %v95
    %v127 = vadd.f32 %v126, %v96
    %v128 = vadd.f32 %v127, %v97
    %v129 = vrot.slane %v128, 4
    %v130 = vadd.f32 %v128, %v129
    %v131 = vrot.slane %v130, 2
    %v132 = vadd.f32 %v130, %v131
    %v133 = vrot.slane %v132, 1
    %v134 = vadd.f32 %v132, %v133
    %v135 = vadd.f32 %v98, %v99
    %v136 = vadd.f32 %v135, %v100
    %v137 = vadd.f32 %v136, %v101
    %v138 = vrot.slane %v137, 4
    %v139 = vadd.f32 %v137, %v138
    %v140 = vrot.slane %v139, 2
    %v141 = vadd.f32 %v139, %v140
    %v142 = vrot.slane %v141, 1
    %v143 = vadd.f32 %v141, %v142
    %v144 = vadd.f32 %v102, %v103
    %v145 = vadd.f32 %v144, %v104
    %v146 = vadd.f32 %v145, %v105
    %v147 = vrot.slane %v146, 4
    %v148 = vadd.f32 %v146, %v147
    %v149 = vrot.slane %v148, 2
    %v150 = vadd.f32 %v148, %v149
    %v151 = vrot.slane %v150, 1
    %v152 = vadd.f32 %v150, %v151
    %v153 = vadd.f32 %v106, %v107
    %v154 = vadd.f32 %v153, %v108
    %v155 = vadd.f32 %v154, %v109
    %v156 = vrot.slane %v155, 4
    %v157 = vadd.f32 %v155, %v156
    %v158 = vrot.slane %v157, 2
    %v159 = vadd.f32 %v157, %v158
    %v160 = vrot.slane %v159, 1
    %v161 = vadd.f32 %v159, %v160
    %v162 = vadd.f32 %v110, %v111
    %v163 = vadd.f32 %v162, %v112
    %v164 = vadd.f32 %v163, %v113
    %v165 = vrot.slane %v164, 4
    %v166 = vadd.f32 %v164, %v165
    %v167 = vrot.slane %v166, 2
    %v168 = vadd.f32 %v166, %v167
    %v169 = vrot.slane %v168, 1
    %v170 = vadd.f32 %v168, %v169
    %v171 = vadd.f32 %v114, %v115
    %v172 = vadd.f32 %v171, %v116
    %v173 = vadd.f32 %v172, %v117
    %v174 = vrot.slane %v173, 4
    %v175 = vadd.f32 %v173, %v174
    %v176 = vrot.slane %v175, 2
    %v177 = vadd.f32 %v175, %v176
    %v178 = vrot.slane %v177, 1
    %v179 = vadd.f32 %v177, %v178
    %v180 = vadd.f32 %v118, %v119
    %v181 = vadd.f32 %v180, %v120
    %v182 = vadd.f32 %v181, %v121
    %v183 = vrot.slane %v182, 4
    %v184 = vadd.f32 %v182, %v183
    %v185 = vrot.slane %v184, 2
    %v186 = vadd.f32 %v184, %v185
    %v187 = vrot.slane %v186, 1
    %v188 = vadd.f32 %v186, %v187
    %v189 = vadd.f32 %v122, %v123
    %v190 = vadd.f32 %v189, %v124
    %v191 = vadd.f32 %v190, %v125
    %v192 = vrot.slane %v191, 4
    %v193 = vadd.f32 %v191, %v192
    %v194 = vrot.slane %v193, 2
    %v195 = vadd.f32 %v193, %v194
    %v196 = vrot.slane %v195, 1
    %v197 = vadd.f32 %v195, %v196
    %v198 = vmul.f32 %v134, 0.03125
    %v199 = vmul.f32 %v143, 0.03125
    %v200 = vmul.f32 %v152, 0.03125
    %v201 = vmul.f32 %v161, 0.03125
    %v202 = vmul.f32 %v170, 0.03125
    %v203 = vmul.f32 %v179, 0.03125
    %v204 = vmul.f32 %v188, 0.03125
    %v205 = vmul.f32 %v197, 0.03125
    %v206 = vpack.c.bf16 %v198, %v198
    %v207 = vpack.c.bf16 %v199, %v199
    %v208 = vpack.c.bf16 %v200, %v200
    %v209 = vpack.c.bf16 %v201, %v201
    %v210 = vpack.c.bf16 %v202, %v202
    %v211 = vpack.c.bf16 %v203, %v203
    %v212 = vpack.c.bf16 %v204, %v204
    %v213 = vpack.c.bf16 %v205, %v205
    %v214 = vld [vmem:[#allocation7] sm:$0xff]
    %v215 = vld [vmem:[#allocation7 + $0x8] sm:$0xff]
    %v216 = vld [vmem:[#allocation7 + $0x10] sm:$0xff]
    %v217 = vld [vmem:[#allocation7 + $0x18] sm:$0xff]
    %v218 = vld [vmem:[#allocation7 + $0x20] sm:$0xff]
    %v219 = vld [vmem:[#allocation7 + $0x28] sm:$0xff]
    %v220 = vld [vmem:[#allocation7 + $0x30] sm:$0xff]
    %v221 = vld [vmem:[#allocation7 + $0x38] sm:$0xff]
    %v222 = vld [vmem:[#allocation7 + $0x40] sm:$0xff]
    %v223 = vld [vmem:[#allocation7 + $0x48] sm:$0xff]
    %v224 = vld [vmem:[#allocation7 + $0x50] sm:$0xff]
    %v225 = vld [vmem:[#allocation7 + $0x58] sm:$0xff]
    %v226 = vld [vmem:[#allocation7 + $0x60] sm:$0xff]
    %v227 = vld [vmem:[#allocation7 + $0x68] sm:$0xff]
    %v228 = vld [vmem:[#allocation7 + $0x70] sm:$0xff]
    %v229 = vld [vmem:[#allocation7 + $0x78] sm:$0xff]
    %v230 = vld [vmem:[#allocation7 + $0x80] sm:$0xff]
    %v231 = vld [vmem:[#allocation7 + $0x88] sm:$0xff]
    %v232 = vld [vmem:[#allocation7 + $0x90] sm:$0xff]
    %v233 = vld [vmem:[#allocation7 + $0x98] sm:$0xff]
    %v234 = vld [vmem:[#allocation7 + $0xa0] sm:$0xff]
    %v235 = vld [vmem:[#allocation7 + $0xa8] sm:$0xff]
    %v236 = vld [vmem:[#allocation7 + $0xb0] sm:$0xff]
    %v237 = vld [vmem:[#allocation7 + $0xb8] sm:$0xff]
    %v238 = vld [vmem:[#allocation7 + $0xc0] sm:$0xff]
    %v239 = vld [vmem:[#allocation7 + $0xc8] sm:$0xff]
    %v240 = vld [vmem:[#allocation7 + $0xd0] sm:$0xff]
    %v241 = vld [vmem:[#allocation7 + $0xd8] sm:$0xff]
    %v242 = vld [vmem:[#allocation7 + $0xe0] sm:$0xff]
    %v243 = vld [vmem:[#allocation7 + $0xe8] sm:$0xff]
    %v244 = vld [vmem:[#allocation7 + $0xf0] sm:$0xff]
    %v245 = vld [vmem:[#allocation7 + $0xf8] sm:$0xff]
    %v246 = vld [vmem:[#allocation5] sm:$0xff]
    %v247 = vld [vmem:[#allocation5 + $0x8] sm:$0xff]
    %v248 = vpack.c.bf16 %v246, %v246
    %v249 = vpack.c.bf16 %v247, %v247
    %v250 = vld [vmem:[#allocation8] sm:$0xff]
    %v251 = vld [vmem:[#allocation8 + $0x8] sm:$0xff]
    %v252 = vld [vmem:[#allocation8 + $0x10] sm:$0xff]
    %v253 = vld [vmem:[#allocation8 + $0x18] sm:$0xff]
    %v254 = vld [vmem:[#allocation8 + $0x20] sm:$0xff]
    %v255 = vld [vmem:[#allocation8 + $0x28] sm:$0xff]
    %v256 = vld [vmem:[#allocation8 + $0x30] sm:$0xff]
    %v257 = vld [vmem:[#allocation8 + $0x38] sm:$0xff]
    %v258 = vld [vmem:[#allocation8 + $0x40] sm:$0xff]
    %v259 = vld [vmem:[#allocation8 + $0x48] sm:$0xff]
    %v260 = vld [vmem:[#allocation8 + $0x50] sm:$0xff]
    %v261 = vld [vmem:[#allocation8 + $0x58] sm:$0xff]
    %v262 = vld [vmem:[#allocation8 + $0x60] sm:$0xff]
    %v263 = vld [vmem:[#allocation8 + $0x68] sm:$0xff]
    %v264 = vld [vmem:[#allocation8 + $0x70] sm:$0xff]
    %v265 = vld [vmem:[#allocation8 + $0x78] sm:$0xff]
    %v266 = vld [vmem:[#allocation8 + $0x80] sm:$0xff]
    %v267 = vld [vmem:[#allocation8 + $0x88] sm:$0xff]
    %v268 = vld [vmem:[#allocation8 + $0x90] sm:$0xff]
    %v269 = vld [vmem:[#allocation8 + $0x98] sm:$0xff]
    %v270 = vld [vmem:[#allocation8 + $0xa0] sm:$0xff]
    %v271 = vld [vmem:[#allocation8 + $0xa8] sm:$0xff]
    %v272 = vld [vmem:[#allocation8 + $0xb0] sm:$0xff]
    %v273 = vld [vmem:[#allocation8 + $0xb8] sm:$0xff]
    %v274 = vld [vmem:[#allocation8 + $0xc0] sm:$0xff]
    %v275 = vld [vmem:[#allocation8 + $0xc8] sm:$0xff]
    %v276 = vld [vmem:[#allocation8 + $0xd0] sm:$0xff]
    %v277 = vld [vmem:[#allocation8 + $0xd8] sm:$0xff]
    %v278 = vld [vmem:[#allocation8 + $0xe0] sm:$0xff]
    %v279 = vld [vmem:[#allocation8 + $0xe8] sm:$0xff]
    %v280 = vld [vmem:[#allocation8 + $0xf0] sm:$0xff]
    %v281 = vld [vmem:[#allocation8 + $0xf8] sm:$0xff]
    %v282 = vld [vmem:[#allocation8 + $0x100] sm:$0xff]
    %v283 = vld [vmem:[#allocation8 + $0x108] sm:$0xff]
    %v284 = vld [vmem:[#allocation8 + $0x110] sm:$0xff]
    %v285 = vld [vmem:[#allocation8 + $0x118] sm:$0xff]
    %v286 = vld [vmem:[#allocation8 + $0x120] sm:$0xff]
    %v287 = vld [vmem:[#allocation8 + $0x128] sm:$0xff]
    %v288 = vld [vmem:[#allocation8 + $0x130] sm:$0xff]
    %v289 = vld [vmem:[#allocation8 + $0x138] sm:$0xff]
    %v290 = vld [vmem:[#allocation8 + $0x140] sm:$0xff]
    %v291 = vld [vmem:[#allocation8 + $0x148] sm:$0xff]
    %v292 = vld [vmem:[#allocation8 + $0x150] sm:$0xff]
    %v293 = vld [vmem:[#allocation8 + $0x158] sm:$0xff]
    %v294 = vld [vmem:[#allocation8 + $0x160] sm:$0xff]
    %v295 = vld [vmem:[#allocation8 + $0x168] sm:$0xff]
    %v296 = vld [vmem:[#allocation8 + $0x170] sm:$0xff]
    %v297 = vld [vmem:[#allocation8 + $0x178] sm:$0xff]
    %v298 = vld [vmem:[#allocation8 + $0x180] sm:$0xff]
    %v299 = vld [vmem:[#allocation8 + $0x188] sm:$0xff]
    %v300 = vld [vmem:[#allocation8 + $0x190] sm:$0xff]
    %v301 = vld [vmem:[#allocation8 + $0x198] sm:$0xff]
    %v302 = vld [vmem:[#allocation8 + $0x1a0] sm:$0xff]
    %v303 = vld [vmem:[#allocation8 + $0x1a8] sm:$0xff]
    %v304 = vld [vmem:[#allocation8 + $0x1b0] sm:$0xff]
    %v305 = vld [vmem:[#allocation8 + $0x1b8] sm:$0xff]
    %v306 = vld [vmem:[#allocation8 + $0x1c0] sm:$0xff]
    %v307 = vld [vmem:[#allocation8 + $0x1c8] sm:$0xff]
    %v308 = vld [vmem:[#allocation8 + $0x1d0] sm:$0xff]
    %v309 = vld [vmem:[#allocation8 + $0x1d8] sm:$0xff]
    %v310 = vld [vmem:[#allocation8 + $0x1e0] sm:$0xff]
    %v311 = vld [vmem:[#allocation8 + $0x1e8] sm:$0xff]
    %v312 = vld [vmem:[#allocation8 + $0x1f0] sm:$0xff]
    %v313 = vld [vmem:[#allocation8 + $0x1f8] sm:$0xff]
    %v378 = vunpack.c.l.b16 %v250
    %v379 = vunpack.c.h.b16 %v250
    %v380 = vunpack.c.l.b16 %v251
    %v381 = vunpack.c.h.b16 %v251
    %v382 = vunpack.c.l.b16 %v252
    %v383 = vunpack.c.h.b16 %v252
    %v384 = vunpack.c.l.b16 %v253
    %v385 = vunpack.c.h.b16 %v253
    %v386 = vunpack.c.l.b16 %v254
    %v387 = vunpack.c.h.b16 %v254
    %v388 = vunpack.c.l.b16 %v255
    %v389 = vunpack.c.h.b16 %v255
    %v390 = vunpack.c.l.b16 %v256
    %v391 = vunpack.c.h.b16 %v256
    %v392 = vunpack.c.l.b16 %v257
    %v393 = vunpack.c.h.b16 %v257
    %v394 = vunpack.c.l.b16 %v258
    %v395 = vunpack.c.h.b16 %v258
    %v396 = vunpack.c.l.b16 %v259
    %v397 = vunpack.c.h.b16 %v259
    %v398 = vunpack.c.l.b16 %v260
    %v399 = vunpack.c.h.b16 %v260
    %v400 = vunpack.c.l.b16 %v261
    %v401 = vunpack.c.h.b16 %v261
    %v402 = vunpack.c.l.b16 %v262
    %v403 = vunpack.c.h.b16 %v262
    %v404 = vunpack.c.l.b16 %v263
    %v405 = vunpack.c.h.b16 %v263
    %v406 = vunpack.c.l.b16 %v264
    %v407 = vunpack.c.h.b16 %v264
    %v408 = vunpack.c.l.b16 %v265
    %v409 = vunpack.c.h.b16 %v265
    %v410 = vunpack.c.l.b16 %v266
    %v411 = vunpack.c.h.b16 %v266
    %v412 = vunpack.c.l.b16 %v267
    %v413 = vunpack.c.h.b16 %v267
    %v414 = vunpack.c.l.b16 %v268
    %v415 = vunpack.c.h.b16 %v268
    %v416 = vunpack.c.l.b16 %v269
    %v417 = vunpack.c.h.b16 %v269
    %v418 = vunpack.c.l.b16 %v270
    %v419 = vunpack.c.h.b16 %v270
    %v420 = vunpack.c.l.b16 %v271
    %v421 = vunpack.c.h.b16 %v271
    %v422 = vunpack.c.l.b16 %v272
    %v423 = vunpack.c.h.b16 %v272
    %v424 = vunpack.c.l.b16 %v273
    %v425 = vunpack.c.h.b16 %v273
    %v426 = vunpack.c.l.b16 %v274
    %v427 = vunpack.c.h.b16 %v274
    %v428 = vunpack.c.l.b16 %v275
    %v429 = vunpack.c.h.b16 %v275
    %v430 = vunpack.c.l.b16 %v276
    %v431 = vunpack.c.h.b16 %v276
    %v432 = vunpack.c.l.b16 %v277
    %v433 = vunpack.c.h.b16 %v277
    %v434 = vunpack.c.l.b16 %v278
    %v435 = vunpack.c.h.b16 %v278
    %v436 = vunpack.c.l.b16 %v279
    %v437 = vunpack.c.h.b16 %v279
    %v438 = vunpack.c.l.b16 %v280
    %v439 = vunpack.c.h.b16 %v280
    %v440 = vunpack.c.l.b16 %v281
    %v441 = vunpack.c.h.b16 %v281
    %v442 = vunpack.c.l.b16 %v282
    %v443 = vunpack.c.h.b16 %v282
    %v444 = vunpack.c.l.b16 %v283
    %v445 = vunpack.c.h.b16 %v283
    %v446 = vunpack.c.l.b16 %v284
    %v447 = vunpack.c.h.b16 %v284
    %v448 = vunpack.c.l.b16 %v285
    %v449 = vunpack.c.h.b16 %v285
    %v450 = vunpack.c.l.b16 %v286
    %v451 = vunpack.c.h.b16 %v286
    %v452 = vunpack.c.l.b16 %v287
    %v453 = vunpack.c.h.b16 %v287
    %v454 = vunpack.c.l.b16 %v288
    %v455 = vunpack.c.h.b16 %v288
    %v456 = vunpack.c.l.b16 %v289
    %v457 = vunpack.c.h.b16 %v289
    %v458 = vunpack.c.l.b16 %v290
    %v459 = vunpack.c.h.b16 %v290
    %v460 = vunpack.c.l.b16 %v291
    %v461 = vunpack.c.h.b16 %v291
    %v462 = vunpack.c.l.b16 %v292
    %v463 = vunpack.c.h.b16 %v292
    %v464 = vunpack.c.l.b16 %v293
    %v465 = vunpack.c.h.b16 %v293
    %v466 = vunpack.c.l.b16 %v294
    %v467 = vunpack.c.h.b16 %v294
    %v468 = vunpack.c.l.b16 %v295
    %v469 = vunpack.c.h.b16 %v295
    %v470 = vunpack.c.l.b16 %v296
    %v471 = vunpack.c.h.b16 %v296
    %v472 = vunpack.c.l.b16 %v297
    %v473 = vunpack.c.h.b16 %v297
    %v474 = vunpack.c.l.b16 %v298
    %v475 = vunpack.c.h.b16 %v298
    %v476 = vunpack.c.l.b16 %v299
    %v477 = vunpack.c.h.b16 %v299
    %v478 = vunpack.c.l.b16 %v300
    %v479 = vunpack.c.h.b16 %v300
    %v480 = vunpack.c.l.b16 %v301
    %v481 = vunpack.c.h.b16 %v301
    %v482 = vunpack.c.l.b16 %v302
    %v483 = vunpack.c.h.b16 %v302
    %v484 = vunpack.c.l.b16 %v303
    %v485 = vunpack.c.h.b16 %v303
    %v486 = vunpack.c.l.b16 %v304
    %v487 = vunpack.c.h.b16 %v304
    %v488 = vunpack.c.l.b16 %v305
    %v489 = vunpack.c.h.b16 %v305
    %v490 = vunpack.c.l.b16 %v306
    %v491 = vunpack.c.h.b16 %v306
    %v492 = vunpack.c.l.b16 %v307
    %v493 = vunpack.c.h.b16 %v307
    %v494 = vunpack.c.l.b16 %v308
    %v495 = vunpack.c.h.b16 %v308
    %v496 = vunpack.c.l.b16 %v309
    %v497 = vunpack.c.h.b16 %v309
    %v498 = vunpack.c.l.b16 %v310
    %v499 = vunpack.c.h.b16 %v310
    %v500 = vunpack.c.l.b16 %v311
    %v501 = vunpack.c.h.b16 %v311
    %v502 = vunpack.c.l.b16 %v312
    %v503 = vunpack.c.h.b16 %v312
    %v504 = vunpack.c.l.b16 %v313
    %v505 = vunpack.c.h.b16 %v313
    %v506 = vpack.c.b16 %v382, %v378
    %v507 = vpack.c.b16 %v383, %v379
    %v508 = vpack.c.b16 %v384, %v380
    %v509 = vpack.c.b16 %v385, %v381
    %v510 = vpack.c.b16 %v390, %v386
    %v511 = vpack.c.b16 %v391, %v387
    %v512 = vpack.c.b16 %v392, %v388
    %v513 = vpack.c.b16 %v393, %v389
    %v514 = vpack.c.b16 %v398, %v394
    %v515 = vpack.c.b16 %v399, %v395
    %v516 = vpack.c.b16 %v400, %v396
    %v517 = vpack.c.b16 %v401, %v397
    %v518 = vpack.c.b16 %v406, %v402
    %v519 = vpack.c.b16 %v407, %v403
    %v520 = vpack.c.b16 %v408, %v404
    %v521 = vpack.c.b16 %v409, %v405
    %v522 = vpack.c.b16 %v414, %v410
    %v523 = vpack.c.b16 %v415, %v411
    %v524 = vpack.c.b16 %v416, %v412
    %v525 = vpack.c.b16 %v417, %v413
    %v526 = vpack.c.b16 %v422, %v418
    %v527 = vpack.c.b16 %v423, %v419
    %v528 = vpack.c.b16 %v424, %v420
    %v529 = vpack.c.b16 %v425, %v421
    %v530 = vpack.c.b16 %v430, %v426
    %v531 = vpack.c.b16 %v431, %v427
    %v532 = vpack.c.b16 %v432, %v428
    %v533 = vpack.c.b16 %v433, %v429
    %v534 = vpack.c.b16 %v438, %v434
    %v535 = vpack.c.b16 %v439, %v435
    %v536 = vpack.c.b16 %v440, %v436
    %v537 = vpack.c.b16 %v441, %v437
    %v538 = vpack.c.b16 %v446, %v442
    %v539 = vpack.c.b16 %v447, %v443
    %v540 = vpack.c.b16 %v448, %v444
    %v541 = vpack.c.b16 %v449, %v445
    %v542 = vpack.c.b16 %v454, %v450
    %v543 = vpack.c.b16 %v455, %v451
    %v544 = vpack.c.b16 %v456, %v452
    %v545 = vpack.c.b16 %v457, %v453
    %v546 = vpack.c.b16 %v462, %v458
    %v547 = vpack.c.b16 %v463, %v459
    %v548 = vpack.c.b16 %v464, %v460
    %v549 = vpack.c.b16 %v465, %v461
    %v550 = vpack.c.b16 %v470, %v466
    %v551 = vpack.c.b16 %v471, %v467
    %v552 = vpack.c.b16 %v472, %v468
    %v553 = vpack.c.b16 %v473, %v469
    %v554 = vpack.c.b16 %v478, %v474
    %v555 = vpack.c.b16 %v479, %v475
    %v556 = vpack.c.b16 %v480, %v476
    %v557 = vpack.c.b16 %v481, %v477
    %v558 = vpack.c.b16 %v486, %v482
    %v559 = vpack.c.b16 %v487, %v483
    %v560 = vpack.c.b16 %v488, %v484
    %v561 = vpack.c.b16 %v489, %v485
    %v562 = vpack.c.b16 %v494, %v490
    %v563 = vpack.c.b16 %v495, %v491
    %v564 = vpack.c.b16 %v496, %v492
    %v565 = vpack.c.b16 %v497, %v493
    %v566 = vpack.c.b16 %v502, %v498
    %v567 = vpack.c.b16 %v503, %v499
    %v568 = vpack.c.b16 %v504, %v500
    %v569 = vpack.c.b16 %v505, %v501
    %634 = vmatprep.subr.bf16.mxu0 %v507
    %635 = vmatpush1.bf16.msra.mxu0 %v506
    %636 = vmatprep.subr.bf16.mxu0 %v511
    %637 = vmatpush1.bf16.msra.mxu0 %v510
    %638 = vmatprep.subr.bf16.mxu0 %v515
    %639 = vmatpush1.bf16.msra.mxu0 %v514
    %640 = vmatprep.subr.bf16.mxu0 %v519
    %641 = vmatpush1.bf16.msra.mxu0 %v518
    %642 = vmatprep.subr.bf16.mxu0 %v523
    %643 = vmatpush1.bf16.msra.mxu0 %v522
    %644 = vmatprep.subr.bf16.mxu0 %v527
    %645 = vmatpush1.bf16.msra.mxu0 %v526
    %646 = vmatprep.subr.bf16.mxu0 %v531
    %647 = vmatpush1.bf16.msra.mxu0 %v530
    %648 = vmatprep.subr.bf16.mxu0 %v535
    %649 = vmatpush1.bf16.msra.mxu0 %v534
    %650 = vmatprep.subr.bf16.mxu0 %v539
    %651 = vmatpush1.bf16.msra.mxu0 %v538
    %652 = vmatprep.subr.bf16.mxu0 %v543
    %653 = vmatpush1.bf16.msra.mxu0 %v542
    %654 = vmatprep.subr.bf16.mxu0 %v547
    %655 = vmatpush1.bf16.msra.mxu0 %v546
    %656 = vmatprep.subr.bf16.mxu0 %v551
    %657 = vmatpush1.bf16.msra.mxu0 %v550
    %658 = vmatprep.subr.bf16.mxu0 %v555
    %659 = vmatpush1.bf16.msra.mxu0 %v554
    %660 = vmatprep.subr.bf16.mxu0 %v559
    %661 = vmatpush1.bf16.msra.mxu0 %v558
    %662 = vmatprep.subr.bf16.mxu0 %v563
    %663 = vmatpush1.bf16.msra.mxu0 %v562
    %664 = vmatprep.subr.bf16.mxu0 %v567
    %665 = vmatpush1.bf16.msra.mxu0 %v566
    %666 = vmatprep.mubr.bf16.mxu0 %v249
    %667 = vmatmul.mubr.bf16.gmra.mrb[0].mxu0 %v248
    %v668 = vpop.f32.mrb[0].mxu0
    %v669 = vadd.f32 0.0, %v668
    %v670 = vpop.f32.mrb[0].mxu0
    %v671 = vadd.f32 0.0, %v670
    %v672 = vpop.f32.mrb[0].mxu0
    %v673 = vpop.f32.mrb[0].mxu0
    %674 = vdwg.mxu0
    %675 = vmatprep.subr.bf16.mxu0 %v509
    %676 = vmatpush1.bf16.msra.mxu0 %v508
    %677 = vmatprep.subr.bf16.mxu0 %v513
    %678 = vmatpush1.bf16.msra.mxu0 %v512
    %679 = vmatprep.subr.bf16.mxu0 %v517
    %680 = vmatpush1.bf16.msra.mxu0 %v516
    %681 = vmatprep.subr.bf16.mxu0 %v521
    %682 = vmatpush1.bf16.msra.mxu0 %v520
    %683 = vmatprep.subr.bf16.mxu0 %v525
    %684 = vmatpush1.bf16.msra.mxu0 %v524
    %685 = vmatprep.subr.bf16.mxu0 %v529
    %686 = vmatpush1.bf16.msra.mxu0 %v528
    %687 = vmatprep.subr.bf16.mxu0 %v533
    %688 = vmatpush1.bf16.msra.mxu0 %v532
    %689 = vmatprep.subr.bf16.mxu0 %v537
    %690 = vmatpush1.bf16.msra.mxu0 %v536
    %691 = vmatprep.subr.bf16.mxu0 %v541
    %692 = vmatpush1.bf16.msra.mxu0 %v540
    %693 = vmatprep.subr.bf16.mxu0 %v545
    %694 = vmatpush1.bf16.msra.mxu0 %v544
    %695 = vmatprep.subr.bf16.mxu0 %v549
    %696 = vmatpush1.bf16.msra.mxu0 %v548
    %697 = vmatprep.subr.bf16.mxu0 %v553
    %698 = vmatpush1.bf16.msra.mxu0 %v552
    %699 = vmatprep.subr.bf16.mxu0 %v557
    %700 = vmatpush1.bf16.msra.mxu0 %v556
    %701 = vmatprep.subr.bf16.mxu0 %v561
    %702 = vmatpush1.bf16.msra.mxu0 %v560
    %703 = vmatprep.subr.bf16.mxu0 %v565
    %704 = vmatpush1.bf16.msra.mxu0 %v564
    %705 = vmatprep.subr.bf16.mxu0 %v569
    %706 = vmatpush1.bf16.msra.mxu0 %v568
    %707 = vmatprep.mubr.bf16.mxu0 %v249
    %708 = vmatmul.mubr.bf16.gmra.mrb[0].mxu0 %v248
    %v709 = vpop.f32.mrb[0].mxu0
    %v710 = vadd.f32 0.0, %v709
    %v711 = vpop.f32.mrb[0].mxu0
    %v712 = vadd.f32 0.0, %v711
    %v713 = vpop.f32.mrb[0].mxu0
    %v714 = vpop.f32.mrb[0].mxu0
    %715 = vdwg.mxu0
    %v724 = vunpack.c.l.b16 %v206
    %v725 = vunpack.c.l.b16 %v207
    %v726 = vunpack.c.l.b16 %v208
    %v727 = vunpack.c.l.b16 %v209
    %v728 = vunpack.c.l.b16 %v210
    %v729 = vunpack.c.l.b16 %v211
    %v730 = vunpack.c.l.b16 %v212
    %v731 = vunpack.c.l.b16 %v213
    %vm732 = vcmask 1041409
    %v733 = vsel %vm732, %v725, %v724
    %vm734 = vcmask 1042434
    %v735 = vsel %vm734, %v726, %v733
    %vm736 = vcmask 1043459
    %v737 = vsel %vm736, %v727, %v735
    %vm738 = vcmask 1044484
    %v739 = vsel %vm738, %v728, %v737
    %vm740 = vcmask 1045509
    %v741 = vsel %vm740, %v729, %v739
    %vm742 = vcmask 1046534
    %v743 = vsel %vm742, %v730, %v741
    %vm744 = vcmask 1047559
    %v745 = vsel %vm744, %v731, %v743
    %v746 = vpack.c.b16 %v745, %v745
    %v780 = vunpack.c.l.b16 %v214
    %v781 = vunpack.c.h.b16 %v214
    %v782 = vunpack.c.l.b16 %v215
    %v783 = vunpack.c.h.b16 %v215
    %v784 = vunpack.c.l.b16 %v216
    %v785 = vunpack.c.h.b16 %v216
    %v786 = vunpack.c.l.b16 %v217
    %v787 = vunpack.c.h.b16 %v217
    %v788 = vunpack.c.l.b16 %v218
    %v789 = vunpack.c.h.b16 %v218
    %v790 = vunpack.c.l.b16 %v219
    %v791 = vunpack.c.h.b16 %v219
    %v792 = vunpack.c.l.b16 %v220
    %v793 = vunpack.c.h.b16 %v220
    %v794 = vunpack.c.l.b16 %v221
    %v795 = vunpack.c.h.b16 %v221
    %v796 = vunpack.c.l.b16 %v222
    %v797 = vunpack.c.h.b16 %v222
    %v798 = vunpack.c.l.b16 %v223
    %v799 = vunpack.c.h.b16 %v223
    %v800 = vunpack.c.l.b16 %v224
    %v801 = vunpack.c.h.b16 %v224
    %v802 = vunpack.c.l.b16 %v225
    %v803 = vunpack.c.h.b16 %v225
    %v804 = vunpack.c.l.b16 %v226
    %v805 = vunpack.c.h.b16 %v226
    %v806 = vunpack.c.l.b16 %v227
    %v807 = vunpack.c.h.b16 %v227
    %v808 = vunpack.c.l.b16 %v228
    %v809 = vunpack.c.h.b16 %v228
    %v810 = vunpack.c.l.b16 %v229
    %v811 = vunpack.c.h.b16 %v229
    %v812 = vunpack.c.l.b16 %v230
    %v813 = vunpack.c.h.b16 %v230
    %v814 = vunpack.c.l.b16 %v231
    %v815 = vunpack.c.h.b16 %v231
    %v816 = vunpack.c.l.b16 %v232
    %v817 = vunpack.c.h.b16 %v232
    %v818 = vunpack.c.l.b16 %v233
    %v819 = vunpack.c.h.b16 %v233
    %v820 = vunpack.c.l.b16 %v234
    %v821 = vunpack.c.h.b16 %v234
    %v822 = vunpack.c.l.b16 %v235
    %v823 = vunpack.c.h.b16 %v235
    %v824 = vunpack.c.l.b16 %v236
    %v825 = vunpack.c.h.b16 %v236
    %v826 = vunpack.c.l.b16 %v237
    %v827 = vunpack.c.h.b16 %v237
    %v828 = vunpack.c.l.b16 %v238
    %v829 = vunpack.c.h.b16 %v238
    %v830 = vunpack.c.l.b16 %v239
    %v831 = vunpack.c.h.b16 %v239
    %v832 = vunpack.c.l.b16 %v240
    %v833 = vunpack.c.h.b16 %v240
    %v834 = vunpack.c.l.b16 %v241
    %v835 = vunpack.c.h.b16 %v241
    %v836 = vunpack.c.l.b16 %v242
    %v837 = vunpack.c.h.b16 %v242
    %v838 = vunpack.c.l.b16 %v243
    %v839 = vunpack.c.h.b16 %v243
    %v840 = vunpack.c.l.b16 %v244
    %v841 = vunpack.c.h.b16 %v244
    %v842 = vunpack.c.l.b16 %v245
    %v843 = vunpack.c.h.b16 %v245
    %v844 = vpack.c.b16 %v784, %v780
    %v845 = vpack.c.b16 %v785, %v781
    %v846 = vpack.c.b16 %v786, %v782
    %v847 = vpack.c.b16 %v787, %v783
    %v848 = vpack.c.b16 %v792, %v788
    %v849 = vpack.c.b16 %v793, %v789
    %v850 = vpack.c.b16 %v794, %v790
    %v851 = vpack.c.b16 %v795, %v791
    %v852 = vpack.c.b16 %v800, %v796
    %v853 = vpack.c.b16 %v801, %v797
    %v854 = vpack.c.b16 %v802, %v798
    %v855 = vpack.c.b16 %v803, %v799
    %v856 = vpack.c.b16 %v808, %v804
    %v857 = vpack.c.b16 %v809, %v805
    %v858 = vpack.c.b16 %v810, %v806
    %v859 = vpack.c.b16 %v811, %v807
    %v860 = vpack.c.b16 %v816, %v812
    %v861 = vpack.c.b16 %v817, %v813
    %v862 = vpack.c.b16 %v818, %v814
    %v863 = vpack.c.b16 %v819, %v815
    %v864 = vpack.c.b16 %v824, %v820
    %v865 = vpack.c.b16 %v825, %v821
    %v866 = vpack.c.b16 %v826, %v822
    %v867 = vpack.c.b16 %v827, %v823
    %v868 = vpack.c.b16 %v832, %v828
    %v869 = vpack.c.b16 %v833, %v829
    %v870 = vpack.c.b16 %v834, %v830
    %v871 = vpack.c.b16 %v835, %v831
    %v872 = vpack.c.b16 %v840, %v836
    %v873 = vpack.c.b16 %v841, %v837
    %v874 = vpack.c.b16 %v842, %v838
    %v875 = vpack.c.b16 %v843, %v839
    %908 = vmatprep.subr.bf16.mxu0 %v845
    %909 = vmatpush1.bf16.msra.mxu0 %v844
    %910 = vmatprep.subr.bf16.mxu0 %v849
    %911 = vmatpush1.bf16.msra.mxu0 %v848
    %912 = vmatprep.subr.bf16.mxu0 %v853
    %913 = vmatpush1.bf16.msra.mxu0 %v852
    %914 = vmatprep.subr.bf16.mxu0 %v857
    %915 = vmatpush1.bf16.msra.mxu0 %v856
    %916 = vmatprep.subr.bf16.mxu0 %v861
    %917 = vmatpush1.bf16.msra.mxu0 %v860
    %918 = vmatprep.subr.bf16.mxu0 %v865
    %919 = vmatpush1.bf16.msra.mxu0 %v864
    %920 = vmatprep.subr.bf16.mxu0 %v869
    %921 = vmatpush1.bf16.msra.mxu0 %v868
    %922 = vmatprep.subr.bf16.mxu0 %v873
    %923 = vmatpush1.bf16.msra.mxu0 %v872
    %924 = vmatprep.subr.bf16.mxu0 0
    %925 = vmatpush1.bf16.msra.mxu0 0
    %926 = vmatprep.subr.bf16.mxu0 0
    %927 = vmatpush1.bf16.msra.mxu0 0
    %928 = vmatprep.subr.bf16.mxu0 0
    %929 = vmatpush1.bf16.msra.mxu0 0
    %930 = vmatprep.subr.bf16.mxu0 0
    %931 = vmatpush1.bf16.msra.mxu0 0
    %932 = vmatprep.subr.bf16.mxu0 0
    %933 = vmatpush1.bf16.msra.mxu0 0
    %934 = vmatprep.subr.bf16.mxu0 0
    %935 = vmatpush1.bf16.msra.mxu0 0
    %936 = vmatprep.subr.bf16.mxu0 0
    %937 = vmatpush1.bf16.msra.mxu0 0
    %938 = vmatprep.subr.bf16.mxu0 0
    %939 = vmatpush1.bf16.msra.mxu0 0
    %940 = vmatprep.mubr.bf16.mxu0 0
    %941 = vmatmul.mubr.bf16.gmra.mrb[0].mxu0 %v746
    %v942 = vpop.f32.mrb[0].mxu0
    %v943 = vadd.f32 %v669, %v942
    %v944 = vpop.f32.mrb[0].mxu0
    %v945 = vadd.f32 %v671, %v944
    %v946 = vpop.f32.mrb[0].mxu0
    %v947 = vpop.f32.mrb[0].mxu0
    %948 = vdwg.mxu0
    %949 = vmatprep.subr.bf16.mxu0 %v847
    %950 = vmatpush1.bf16.msra.mxu0 %v846
    %951 = vmatprep.subr.bf16.mxu0 %v851
    %952 = vmatpush1.bf16.msra.mxu0 %v850
    %953 = vmatprep.subr.bf16.mxu0 %v855
    %954 = vmatpush1.bf16.msra.mxu0 %v854
    %955 = vmatprep.subr.bf16.mxu0 %v859
    %956 = vmatpush1.bf16.msra.mxu0 %v858
    %957 = vmatprep.subr.bf16.mxu0 %v863
    %958 = vmatpush1.bf16.msra.mxu0 %v862
    %959 = vmatprep.subr.bf16.mxu0 %v867
    %960 = vmatpush1.bf16.msra.mxu0 %v866
    %961 = vmatprep.subr.bf16.mxu0 %v871
    %962 = vmatpush1.bf16.msra.mxu0 %v870
    %963 = vmatprep.subr.bf16.mxu0 %v875
    %964 = vmatpush1.bf16.msra.mxu0 %v874
    %965 = vmatprep.subr.bf16.mxu0 0
    %966 = vmatpush1.bf16.msra.mxu0 0
    %967 = vmatprep.subr.bf16.mxu0 0
    %968 = vmatpush1.bf16.msra.mxu0 0
    %969 = vmatprep.subr.bf16.mxu0 0
    %970 = vmatpush1.bf16.msra.mxu0 0
    %971 = vmatprep.subr.bf16.mxu0 0
    %972 = vmatpush1.bf16.msra.mxu0 0
    %973 = vmatprep.subr.bf16.mxu0 0
    %974 = vmatpush1.bf16.msra.mxu0 0
    %975 = vmatprep.subr.bf16.mxu0 0
    %976 = vmatpush1.bf16.msra.mxu0 0
    %977 = vmatprep.subr.bf16.mxu0 0
    %978 = vmatpush1.bf16.msra.mxu0 0
    %979 = vmatprep.subr.bf16.mxu0 0
    %980 = vmatpush1.bf16.msra.mxu0 0
    %981 = vmatprep.mubr.bf16.mxu0 0
    %982 = vmatmul.mubr.bf16.gmra.mrb[0].mxu0 %v746
    %v983 = vpop.f32.mrb[0].mxu0
    %v984 = vadd.f32 %v710, %v983
    %v985 = vpop.f32.mrb[0].mxu0
    %v986 = vadd.f32 %v712, %v985
    %v987 = vpop.f32.mrb[0].mxu0
    %v988 = vpop.f32.mrb[0].mxu0
    %989 = vdwg.mxu0
    %v990 = vld [vmem:[%s4] sm:$0xf]
    %v992 = vlaneseq
    %v993 = vshrl.u32 %v992, 7
    %v994 = vsub.s32 0, %v993
    %v995 = vrot.slane %v990, %v994
    %v996 = vlaneseq
    %v997 = vshrl.u32 %v996, 7
    %v998 = vsub.s32 1, %v997
    %v999 = vrot.slane %v990, %v998
    %v1000 = vlaneseq
    %v1001 = vshrl.u32 %v1000, 7
    %v1002 = vsub.s32 2, %v1001
    %v1003 = vrot.slane %v990, %v1002
    %v1004 = vlaneseq
    %v1005 = vshrl.u32 %v1004, 7
    %v1006 = vsub.s32 3, %v1005
    %v1007 = vrot.slane %v990, %v1006
    %v1012 = vadd.f32 %v943, %v995
    %v1013 = vadd.f32 %v945, %v999
    %v1014 = vadd.f32 %v984, %v1003
    %v1015 = vadd.f32 %v986, %v1007
    %v1016 = vmul.f32 %v1012, 0.5
    %v1017 = vmul.f32 %v1013, 0.5
    %v1018 = vmul.f32 %v1014, 0.5
    %v1019 = vmul.f32 %v1015, 0.5
    %v1020 = vmul.f32 %v1012, 0.70710677
    %v1021 = vmul.f32 %v1013, 0.70710677
    %v1022 = vmul.f32 %v1014, 0.70710677
    %v1023 = vmul.f32 %v1015, 0.70710677
    %v1024 = verf.f32.pop %v1020
    %v1025 = verf.f32.pop %v1021
    %v1026 = verf.f32.pop %v1022
    %v1027 = verf.f32.pop %v1023
    %v1028 = vadd.f32 %v1024, 1.0
    %v1029 = vadd.f32 %v1025, 1.0
    %v1030 = vadd.f32 %v1026, 1.0
    %v1031 = vadd.f32 %v1027, 1.0
    %v1032 = vmul.f32 %v1016, %v1028
    %v1033 = vmul.f32 %v1017, %v1029
    %v1034 = vmul.f32 %v1018, %v1030
    %v1035 = vmul.f32 %v1019, %v1031
    %v1036 = vpack.c.bf16 %v1032, %v1032
    %v1037 = vpack.c.bf16 %v1033, %v1033
    %v1038 = vpack.c.bf16 %v1034, %v1034
    %v1039 = vpack.c.bf16 %v1035, %v1035
    %v1040 = vld [vmem:[#allocation10] sm:$0xf]
    %v1041 = vld [vmem:[#allocation10 + $0x4] sm:$0xf]
    %v1042 = vld [vmem:[#allocation10 + $0x8] sm:$0xf]
    %v1043 = vld [vmem:[#allocation10 + $0xc] sm:$0xf]
    %v1044 = vld [vmem:[#allocation10 + $0x10] sm:$0xf]
    %v1045 = vld [vmem:[#allocation10 + $0x14] sm:$0xf]
    %v1046 = vld [vmem:[#allocation10 + $0x18] sm:$0xf]
    %v1047 = vld [vmem:[#allocation10 + $0x1c] sm:$0xf]
    %v1048 = vld [vmem:[#allocation10 + $0x20] sm:$0xf]
    %v1049 = vld [vmem:[#allocation10 + $0x24] sm:$0xf]
    %v1050 = vld [vmem:[#allocation10 + $0x28] sm:$0xf]
    %v1051 = vld [vmem:[#allocation10 + $0x2c] sm:$0xf]
    %v1052 = vld [vmem:[#allocation10 + $0x30] sm:$0xf]
    %v1053 = vld [vmem:[#allocation10 + $0x34] sm:$0xf]
    %v1054 = vld [vmem:[#allocation10 + $0x38] sm:$0xf]
    %v1055 = vld [vmem:[#allocation10 + $0x3c] sm:$0xf]
    %v1056 = vld [vmem:[#allocation10 + $0x40] sm:$0xf]
    %v1057 = vld [vmem:[#allocation10 + $0x44] sm:$0xf]
    %v1058 = vld [vmem:[#allocation10 + $0x48] sm:$0xf]
    %v1059 = vld [vmem:[#allocation10 + $0x4c] sm:$0xf]
    %v1060 = vld [vmem:[#allocation10 + $0x50] sm:$0xf]
    %v1061 = vld [vmem:[#allocation10 + $0x54] sm:$0xf]
    %v1062 = vld [vmem:[#allocation10 + $0x58] sm:$0xf]
    %v1063 = vld [vmem:[#allocation10 + $0x5c] sm:$0xf]
    %v1064 = vld [vmem:[#allocation10 + $0x60] sm:$0xf]
    %v1065 = vld [vmem:[#allocation10 + $0x64] sm:$0xf]
    %v1066 = vld [vmem:[#allocation10 + $0x68] sm:$0xf]
    %v1067 = vld [vmem:[#allocation10 + $0x6c] sm:$0xf]
    %v1068 = vld [vmem:[#allocation10 + $0x70] sm:$0xf]
    %v1069 = vld [vmem:[#allocation10 + $0x74] sm:$0xf]
    %v1070 = vld [vmem:[#allocation10 + $0x78] sm:$0xf]
    %v1071 = vld [vmem:[#allocation10 + $0x7c] sm:$0xf]
    %v1072 = vld [vmem:[#allocation10 + $0x80] sm:$0xf]
    %v1073 = vld [vmem:[#allocation10 + $0x84] sm:$0xf]
    %v1074 = vld [vmem:[#allocation10 + $0x88] sm:$0xf]
    %v1075 = vld [vmem:[#allocation10 + $0x8c] sm:$0xf]
    %v1076 = vld [vmem:[#allocation10 + $0x90] sm:$0xf]
    %v1077 = vld [vmem:[#allocation10 + $0x94] sm:$0xf]
    %v1078 = vld [vmem:[#allocation10 + $0x98] sm:$0xf]
    %v1079 = vld [vmem:[#allocation10 + $0x9c] sm:$0xf]
    %v1080 = vld [vmem:[#allocation10 + $0xa0] sm:$0xf]
    %v1081 = vld [vmem:[#allocation10 + $0xa4] sm:$0xf]
    %v1082 = vld [vmem:[#allocation10 + $0xa8] sm:$0xf]
    %v1083 = vld [vmem:[#allocation10 + $0xac] sm:$0xf]
    %v1084 = vld [vmem:[#allocation10 + $0xb0] sm:$0xf]
    %v1085 = vld [vmem:[#allocation10 + $0xb4] sm:$0xf]
    %v1086 = vld [vmem:[#allocation10 + $0xb8] sm:$0xf]
    %v1087 = vld [vmem:[#allocation10 + $0xbc] sm:$0xf]
    %v1088 = vld [vmem:[#allocation10 + $0xc0] sm:$0xf]
    %v1089 = vld [vmem:[#allocation10 + $0xc4] sm:$0xf]
    %v1090 = vld [vmem:[#allocation10 + $0xc8] sm:$0xf]
    %v1091 = vld [vmem:[#allocation10 + $0xcc] sm:$0xf]
    %v1092 = vld [vmem:[#allocation10 + $0xd0] sm:$0xf]
    %v1093 = vld [vmem:[#allocation10 + $0xd4] sm:$0xf]
    %v1094 = vld [vmem:[#allocation10 + $0xd8] sm:$0xf]
    %v1095 = vld [vmem:[#allocation10 + $0xdc] sm:$0xf]
    %v1096 = vld [vmem:[#allocation10 + $0xe0] sm:$0xf]
    %v1097 = vld [vmem:[#allocation10 + $0xe4] sm:$0xf]
    %v1098 = vld [vmem:[#allocation10 + $0xe8] sm:$0xf]
    %v1099 = vld [vmem:[#allocation10 + $0xec] sm:$0xf]
    %v1100 = vld [vmem:[#allocation10 + $0xf0] sm:$0xf]
    %v1101 = vld [vmem:[#allocation10 + $0xf4] sm:$0xf]
    %v1102 = vld [vmem:[#allocation10 + $0xf8] sm:$0xf]
    %v1103 = vld [vmem:[#allocation10 + $0xfc] sm:$0xf]
    %v1104 = vld [vmem:[%s6] sm:$0x1]
    %v1106 = vlaneseq
    %v1107 = vshrl.u32 %v1106, 7
    %v1108 = vsub.s32 0, %v1107
    %v1109 = vrot.slane %v1104, %v1108
    %v1175 = vunpack.c.l.b16 %v1040
    %v1176 = vunpack.c.l.b16 %v1041
    %v1177 = vunpack.c.l.b16 %v1042
    %v1178 = vunpack.c.l.b16 %v1043
    %v1179 = vunpack.c.l.b16 %v1044
    %v1180 = vunpack.c.l.b16 %v1045
    %v1181 = vunpack.c.l.b16 %v1046
    %v1182 = vunpack.c.l.b16 %v1047
    %v1183 = vunpack.c.l.b16 %v1048
    %v1184 = vunpack.c.l.b16 %v1049
    %v1185 = vunpack.c.l.b16 %v1050
    %v1186 = vunpack.c.l.b16 %v1051
    %v1187 = vunpack.c.l.b16 %v1052
    %v1188 = vunpack.c.l.b16 %v1053
    %v1189 = vunpack.c.l.b16 %v1054
    %v1190 = vunpack.c.l.b16 %v1055
    %v1191 = vunpack.c.l.b16 %v1056
    %v1192 = vunpack.c.l.b16 %v1057
    %v1193 = vunpack.c.l.b16 %v1058
    %v1194 = vunpack.c.l.b16 %v1059
    %v1195 = vunpack.c.l.b16 %v1060
    %v1196 = vunpack.c.l.b16 %v1061
    %v1197 = vunpack.c.l.b16 %v1062
    %v1198 = vunpack.c.l.b16 %v1063
    %v1199 = vunpack.c.l.b16 %v1064
    %v1200 = vunpack.c.l.b16 %v1065
    %v1201 = vunpack.c.l.b16 %v1066
    %v1202 = vunpack.c.l.b16 %v1067
    %v1203 = vunpack.c.l.b16 %v1068
    %v1204 = vunpack.c.l.b16 %v1069
    %v1205 = vunpack.c.l.b16 %v1070
    %v1206 = vunpack.c.l.b16 %v1071
    %v1207 = vunpack.c.l.b16 %v1072
    %v1208 = vunpack.c.l.b16 %v1073
    %v1209 = vunpack.c.l.b16 %v1074
    %v1210 = vunpack.c.l.b16 %v1075
    %v1211 = vunpack.c.l.b16 %v1076
    %v1212 = vunpack.c.l.b16 %v1077
    %v1213 = vunpack.c.l.b16 %v1078
    %v1214 = vunpack.c.l.b16 %v1079
    %v1215 = vunpack.c.l.b16 %v1080
    %v1216 = vunpack.c.l.b16 %v1081
    %v1217 = vunpack.c.l.b16 %v1082
    %v1218 = vunpack.c.l.b16 %v1083
    %v1219 = vunpack.c.l.b16 %v1084
    %v1220 = vunpack.c.l.b16 %v1085
    %v1221 = vunpack.c.l.b16 %v1086
    %v1222 = vunpack.c.l.b16 %v1087
    %v1223 = vunpack.c.l.b16 %v1088
    %v1224 = vunpack.c.l.b16 %v1089
    %v1225 = vunpack.c.l.b16 %v1090
    %v1226 = vunpack.c.l.b16 %v1091
    %v1227 = vunpack.c.l.b16 %v1092
    %v1228 = vunpack.c.l.b16 %v1093
    %v1229 = vunpack.c.l.b16 %v1094
    %v1230 = vunpack.c.l.b16 %v1095
    %v1231 = vunpack.c.l.b16 %v1096
    %v1232 = vunpack.c.l.b16 %v1097
    %v1233 = vunpack.c.l.b16 %v1098
    %v1234 = vunpack.c.l.b16 %v1099
    %v1235 = vunpack.c.l.b16 %v1100
    %v1236 = vunpack.c.l.b16 %v1101
    %v1237 = vunpack.c.l.b16 %v1102
    %v1238 = vunpack.c.l.b16 %v1103
    %v1239 = vpack.c.b16 %v1176, %v1175
    %v1240 = vpack.c.b16 %v1178, %v1177
    %v1241 = vpack.c.b16 %v1180, %v1179
    %v1242 = vpack.c.b16 %v1182, %v1181
    %v1243 = vpack.c.b16 %v1184, %v1183
    %v1244 = vpack.c.b16 %v1186, %v1185
    %v1245 = vpack.c.b16 %v1188, %v1187
    %v1246 = vpack.c.b16 %v1190, %v1189
    %v1247 = vpack.c.b16 %v1192, %v1191
    %v1248 = vpack.c.b16 %v1194, %v1193
    %v1249 = vpack.c.b16 %v1196, %v1195
    %v1250 = vpack.c.b16 %v1198, %v1197
    %v1251 = vpack.c.b16 %v1200, %v1199
    %v1252 = vpack.c.b16 %v1202, %v1201
    %v1253 = vpack.c.b16 %v1204, %v1203
    %v1254 = vpack.c.b16 %v1206, %v1205
    %v1255 = vpack.c.b16 %v1208, %v1207
    %v1256 = vpack.c.b16 %v1210, %v1209
    %v1257 = vpack.c.b16 %v1212, %v1211
    %v1258 = vpack.c.b16 %v1214, %v1213
    %v1259 = vpack.c.b16 %v1216, %v1215
    %v1260 = vpack.c.b16 %v1218, %v1217
    %v1261 = vpack.c.b16 %v1220, %v1219
    %v1262 = vpack.c.b16 %v1222, %v1221
    %v1263 = vpack.c.b16 %v1224, %v1223
    %v1264 = vpack.c.b16 %v1226, %v1225
    %v1265 = vpack.c.b16 %v1228, %v1227
    %v1266 = vpack.c.b16 %v1230, %v1229
    %v1267 = vpack.c.b16 %v1232, %v1231
    %v1268 = vpack.c.b16 %v1234, %v1233
    %v1269 = vpack.c.b16 %v1236, %v1235
    %v1270 = vpack.c.b16 %v1238, %v1237
    %1303 = vmatprep.subr.bf16.mxu0 0
    %1304 = vmatpush1.bf16.msra.mxu0 %v1239
    %1305 = vmatprep.subr.bf16.mxu0 0
    %1306 = vmatpush1.bf16.msra.mxu0 %v1240
    %1307 = vmatprep.subr.bf16.mxu0 0
    %1308 = vmatpush1.bf16.msra.mxu0 %v1241
    %1309 = vmatprep.subr.bf16.mxu0 0
    %1310 = vmatpush1.bf16.msra.mxu0 %v1242
    %1311 = vmatprep.subr.bf16.mxu0 0
    %1312 = vmatpush1.bf16.msra.mxu0 %v1243
    %1313 = vmatprep.subr.bf16.mxu0 0
    %1314 = vmatpush1.bf16.msra.mxu0 %v1244
    %1315 = vmatprep.subr.bf16.mxu0 0
    %1316 = vmatpush1.bf16.msra.mxu0 %v1245
    %1317 = vmatprep.subr.bf16.mxu0 0
    %1318 = vmatpush1.bf16.msra.mxu0 %v1246
    %1319 = vmatprep.subr.bf16.mxu0 0
    %1320 = vmatpush1.bf16.msra.mxu0 %v1247
    %1321 = vmatprep.subr.bf16.mxu0 0
    %1322 = vmatpush1.bf16.msra.mxu0 %v1248
    %1323 = vmatprep.subr.bf16.mxu0 0
    %1324 = vmatpush1.bf16.msra.mxu0 %v1249
    %1325 = vmatprep.subr.bf16.mxu0 0
    %1326 = vmatpush1.bf16.msra.mxu0 %v1250
    %1327 = vmatprep.subr.bf16.mxu0 0
    %1328 = vmatpush1.bf16.msra.mxu0 %v1251
    %1329 = vmatprep.subr.bf16.mxu0 0
    %1330 = vmatpush1.bf16.msra.mxu0 %v1252
    %1331 = vmatprep.subr.bf16.mxu0 0
    %1332 = vmatpush1.bf16.msra.mxu0 %v1253
    %1333 = vmatprep.subr.bf16.mxu0 0
    %1334 = vmatpush1.bf16.msra.mxu0 %v1254
    %1335 = vmatprep.mubr.bf16.mxu0 %v1037
    %1336 = vmatmul.mubr.bf16.gmra.mrb[0].mxu0 %v1036
    %v1337 = vpop.f32.mrb[0].mxu0
    %v1338 = vadd.f32 %v1109, %v1337
    %v1339 = vpop.f32.mrb[0].mxu0
    %v1340 = vpop.f32.mrb[0].mxu0
    %v1341 = vpop.f32.mrb[0].mxu0
    %1342 = vdwg.mxu0
    %1343 = vmatprep.subr.bf16.mxu0 0
    %1344 = vmatpush1.bf16.msra.mxu0 %v1255
    %1345 = vmatprep.subr.bf16.mxu0 0
    %1346 = vmatpush1.bf16.msra.mxu0 %v1256
    %1347 = vmatprep.subr.bf16.mxu0 0
    %1348 = vmatpush1.bf16.msra.mxu0 %v1257
    %1349 = vmatprep.subr.bf16.mxu0 0
    %1350 = vmatpush1.bf16.msra.mxu0 %v1258
    %1351 = vmatprep.subr.bf16.mxu0 0
    %1352 = vmatpush1.bf16.msra.mxu0 %v1259
    %1353 = vmatprep.subr.bf16.mxu0 0
    %1354 = vmatpush1.bf16.msra.mxu0 %v1260
    %1355 = vmatprep.subr.bf16.mxu0 0
    %1356 = vmatpush1.bf16.msra.mxu0 %v1261
    %1357 = vmatprep.subr.bf16.mxu0 0
    %1358 = vmatpush1.bf16.msra.mxu0 %v1262
    %1359 = vmatprep.subr.bf16.mxu0 0
    %1360 = vmatpush1.bf16.msra.mxu0 %v1263
    %1361 = vmatprep.subr.bf16.mxu0 0
    %1362 = vmatpush1.bf16.msra.mxu0 %v1264
    %1363 = vmatprep.subr.bf16.mxu0 0
    %1364 = vmatpush1.bf16.msra.mxu0 %v1265
    %1365 = vmatprep.subr.bf16.mxu0 0
    %1366 = vmatpush1.bf16.msra.mxu0 %v1266
    %1367 = vmatprep.subr.bf16.mxu0 0
    %1368 = vmatpush1.bf16.msra.mxu0 %v1267
    %1369 = vmatprep.subr.bf16.mxu0 0
    %1370 = vmatpush1.bf16.msra.mxu0 %v1268
    %1371 = vmatprep.subr.bf16.mxu0 0
    %1372 = vmatpush1.bf16.msra.mxu0 %v1269
    %1373 = vmatprep.subr.bf16.mxu0 0
    %1374 = vmatpush1.bf16.msra.mxu0 %v1270
    %1375 = vmatprep.mubr.bf16.mxu0 %v1039
    %1376 = vmatmul.mubr.bf16.gmra.mrb[0].mxu0 %v1038
    %v1377 = vpop.f32.mrb[0].mxu0
    %v1378 = vadd.f32 %v1338, %v1377
    %v1379 = vpop.f32.mrb[0].mxu0
    %v1380 = vpop.f32.mrb[0].mxu0
    %v1381 = vpop.f32.mrb[0].mxu0
    %1382 = vdwg.mxu0
    %v1383 = vtanh.pop %v1378
    %1384 = vst [vmem:[#allocation11] sm:$0xff] %v1383
    // Predicated region
    $region50: #{tpu_custom_call.1} parent=1 // pred_check
      _
    $region51: #{tpu_custom_call.1} parent=1 // pred_check_branch
      %1386 = sbr.rel (0) target = $region53
    $region52: #{tpu_custom_call.1} parent=1 // pred_region
      %s1388 = ssub.s32 128, 128
      %1389 = vsyncadd [#allocation4], %s1388
      %s1391 = sshll.u32 [#allocation11], 4
      %s1392 = int_to_ptr.vmem [resolvable:$true] %s1391
      %1394 = dma.vmem_to_hbm [thread:$0]  %s1392, 128, %s7, [#allocation4]
    $region53: #{tpu_custom_call.1} parent=1 // pred_fallthru
      _
    // Predicated region
    $region54: #{tpu_custom_call.1} parent=1 // pred_check
      _
    $region55: #{tpu_custom_call.1} parent=1 // pred_check_branch
      %1396 = sbr.rel (0) target = $region57
    $region56: #{tpu_custom_call.1} parent=1 // pred_region
      %1397 = dma.done [#allocation4], 128
    $region57: #{tpu_custom_call.1} parent=1 // pred_fallthru
      _
    %1398 = vsyncpa [#allocation3], 1
    %1399 = vsyncpa [#allocation6], 1
    %1400 = vsyncpa [#allocation9], 1
    %1401 = vsyncpa [#allocation4], 1

</llo_original>
